<compile_context>
chip_gen: v7x
topology: tpu7x:2x2x1
jax: 0.10.0
libtpu: 0.0.40
codegen_flags: <defaults>
</compile_context>

<pallas_src>
import functools

import jax
import jax.numpy as jnp
from jax.experimental import pallas as pl
from jax.experimental.pallas import tpu as pltpu

IN_DIM = 320    # nn.Linear(320, 128) input features
HID_DIM = 128
OUT_DIM = 128


def _round_up(n, m):
    return (n + m - 1) // m * m


def _cl_kernel(pep_ref, pro_ref,
               w1p_ref, b1p_ref, w2p_ref, b2p_ref,
               w1r_ref, b1r_ref, w2r_ref, b2r_ref,
               pep_o_ref, pro_o_ref, *, compute_dtype):
    """One batch tile: (Linear -> ReLU -> Linear -> L2 normalize) x 2 heads."""

    def head(x_ref, w1_ref, b1_ref, w2_ref, b2_ref, o_ref):
        # Activations arrive as f32 [TB, 320]; cast to the MXU dtype here
        # (inside the kernel) instead of materializing a cast copy in HBM.
        x = x_ref[...].astype(compute_dtype)
        w1 = w1_ref[...]                                   # [320, 128]
        w2 = w2_ref[...]                                   # [128, 128]

        # First Linear + ReLU (MXU matmul, f32 accumulation; bias in f32).
        h = jnp.dot(x, w1, preferred_element_type=jnp.float32) + b1_ref[...]
        h = jnp.maximum(h, 0.0)

        # Second Linear.
        y = jnp.dot(h.astype(compute_dtype), w2,
                    preferred_element_type=jnp.float32) + b2_ref[...]

        # F.normalize(p=2, dim=1): y / max(||y||, 1e-12)
        #   == y * rsqrt(max(||y||^2, 1e-24))
        sq = jnp.sum(y * y, axis=-1, keepdims=True)        # [TB, 1]
        y = y * jax.lax.rsqrt(jnp.maximum(sq, 1e-24))

        o_ref[...] = y.astype(o_ref.dtype)

    head(pep_ref, w1p_ref, b1p_ref, w2p_ref, b2p_ref, pep_o_ref)
    head(pro_ref, w1r_ref, b1r_ref, w2r_ref, b2r_ref, pro_o_ref)


def cl_model_forward(params, pep, pro, *, max_tile_b=1024,
                     compute_dtype=jnp.bfloat16, out_dtype=jnp.float32):
    """Fused forward for both projection heads.

    pep, pro: [B, 320] float arrays (same batch size, contrastive pairs).
    Returns (pep_out, pro_out), each [B, 128], L2-normalized along dim 1.
    Weights are expected as [in_features, out_features] (y = x @ W + b); a
    PyTorch nn.Linear state_dict would need its weights transposed.
    """
    assert pep.shape == pro.shape and pep.shape[1] == IN_DIM
    B = pep.shape[0]

    # Balanced batch tiling: near-equal tiles, each a multiple of 16 rows
    # (bf16 sublane packing), instead of padding up to a full max tile.
    n_tiles = pl.cdiv(B, max_tile_b)
    tile_b = _round_up(pl.cdiv(B, n_tiles), 16)
    B_pad = n_tiles * tile_b

    # Only a (usually tiny) zero-pad of the batch dim; no stack, no feature
    # pad, no dtype cast of the activations on the host/XLA side.
    if B_pad != B:
        pep = jnp.pad(pep, ((0, B_pad - B), (0, 0)))
        pro = jnp.pad(pro, ((0, B_pad - B), (0, 0)))

    def prep(w, b):
        return w.astype(compute_dtype), jnp.reshape(b, (1, -1)).astype(jnp.float32)

    w1p, b1p = prep(params["pep"][0], params["pep"][1])
    w2p, b2p = prep(params["pep"][2], params["pep"][3])
    w1r, b1r = prep(params["pro"][0], params["pro"][1])
    w2r, b2r = prep(params["pro"][2], params["pro"][3])

    # Activations / outputs: new tile per grid step.  Weights / biases:
    # index_map independent of the batch index -> resident in VMEM across the
    # whole grid (and per-core on v7x megacore).
    x_spec = pl.BlockSpec((tile_b, IN_DIM), lambda i: (i, 0))
    o_spec = pl.BlockSpec((tile_b, OUT_DIM), lambda i: (i, 0))

    def w_spec(shape):
        return pl.BlockSpec(shape, lambda i: (0, 0))

    pep_out, pro_out = pl.pallas_call(
        functools.partial(_cl_kernel, compute_dtype=compute_dtype),
        out_shape=(jax.ShapeDtypeStruct((B_pad, OUT_DIM), out_dtype),
                   jax.ShapeDtypeStruct((B_pad, OUT_DIM), out_dtype)),
        grid_spec=pltpu.PrefetchScalarGridSpec(
            num_scalar_prefetch=0,
            grid=(n_tiles,),
            in_specs=[
                x_spec, x_spec,
                w_spec((IN_DIM, HID_DIM)), w_spec((1, HID_DIM)),
                w_spec((HID_DIM, OUT_DIM)), w_spec((1, OUT_DIM)),
                w_spec((IN_DIM, HID_DIM)), w_spec((1, HID_DIM)),
                w_spec((HID_DIM, OUT_DIM)), w_spec((1, OUT_DIM)),
            ],
            out_specs=[o_spec, o_spec],
        ),
        compiler_params=pltpu.CompilerParams(
            dimension_semantics=("parallel",),
            # tile_b=1024 double-buffered: ~5 MiB inputs + ~2 MiB outputs +
            # resident weights; explicit limit keeps headroom on v7x (64 MiB
            # physical VMEM vs 128 MiB on v5e/v6e).
            vmem_limit_bytes=32 * 1024 * 1024,
        ),
    )(pep, pro, w1p, b1p, w2p, b2p, w1r, b1r, w2r, b2r)

    # Padded rows hold normalized garbage (bias adds make them nonzero), so
    # slice back only when padding was actually applied.
    if B_pad != B:
        pep_out = pep_out[:B]
        pro_out = pro_out[:B]
    return pep_out, pro_out


def init_params(key):
    """Deterministic synthetic parameters (shapes from CLModel.__init__),
    stored as [in_features, out_features] so the kernel computes y = x @ W + b."""
    ks = jax.random.split(key, 8)

    def lin(kw, kb, fan_in, fan_out):
        bound = 1.0 / jnp.sqrt(fan_in)
        w = jax.random.uniform(kw, (fan_in, fan_out), jnp.float32, -bound, bound)
        b = jax.random.uniform(kb, (1, fan_out), jnp.float32, -bound, bound)
        return w, b

    pep_w1, pep_b1 = lin(ks[0], ks[1], IN_DIM, HID_DIM)
    pep_w2, pep_b2 = lin(ks[2], ks[3], HID_DIM, OUT_DIM)
    pro_w1, pro_b1 = lin(ks[4], ks[5], IN_DIM, HID_DIM)
    pro_w2, pro_b2 = lin(ks[6], ks[7], HID_DIM, OUT_DIM)
    return dict(
        pep=(pep_w1, pep_b1, pep_w2, pep_b2),
        pro=(pro_w1, pro_b1, pro_w2, pro_b2),
    )


def _ref_proj(x, w1, b1, w2, b2):
    """Plain-JAX f32 reference matching PyTorch CLModel for one head."""
    h = jnp.maximum(x @ w1 + b1, 0.0)
    y = h @ w2 + b2
    n = jnp.sqrt(jnp.sum(y * y, axis=1, keepdims=True))
    return y / jnp.maximum(n, 1e-12)


if __name__ == "__main__":
    key = jax.random.PRNGKey(0)
    k_params, k_pep, k_pro = jax.random.split(key, 3)
    params = init_params(k_params)

    # Small demo batch, deliberately NOT a multiple of 16 to exercise padding.
    B = 24
    pep = jax.random.normal(k_pep, (B, IN_DIM), jnp.float32)
    pro = jax.random.normal(k_pro, (B, IN_DIM), jnp.float32)

    pep_out, pro_out = cl_model_forward(params, pep, pro)
    jax.block_until_ready((pep_out, pro_out))
    assert pep_out.shape == (B, OUT_DIM) and pro_out.shape == (B, OUT_DIM)

    # bf16 matmul inputs with f32 accumulation -> loose tolerance.
    ref_pep = _ref_proj(pep, *params["pep"])
    ref_pro = _ref_proj(pro, *params["pro"])
    assert jnp.allclose(pep_out, ref_pep, atol=3e-2), "pep mismatch (bf16 path)"
    assert jnp.allclose(pro_out, ref_pro, atol=3e-2), "pro mismatch (bf16 path)"

    # f32 compute path, multi-tile: B=600 with max_tile_b=512 -> 2 balanced
    # tiles of 304 rows (8 padded rows instead of 424).  Much tighter
    # tolerance than bf16; kept modest to cover MXU f32-pass behavior across
    # TPU generations.
    B2 = 600
    k_pep2, k_pro2 = jax.random.split(jax.random.PRNGKey(1))
    pep2 = jax.random.normal(k_pep2, (B2, IN_DIM), jnp.float32)
    pro2 = jax.random.normal(k_pro2, (B2, IN_DIM), jnp.float32)
    pep2_out, pro2_out = cl_model_forward(
        params, pep2, pro2, max_tile_b=512, compute_dtype=jnp.float32)
    jax.block_until_ready((pep2_out, pro2_out))
    assert jnp.allclose(pep2_out, _ref_proj(pep2, *params["pep"]), atol=2e-3)
    assert jnp.allclose(pro2_out, _ref_proj(pro2, *params["pro"]), atol=2e-3)

    print("KERNEL_OK")
</pallas_src>

<mosaic_0001>
module attributes {stable_mosaic.version = 11 : i64} {
  func.func @_cl_kernel(%arg0: i32, %arg1: memref<32x320xf32, #tpu.memory_space<vmem>>, %arg2: memref<32x320xf32, #tpu.memory_space<vmem>>, %arg3: memref<320x128xbf16, #tpu.memory_space<vmem>>, %arg4: memref<1x128xf32, #tpu.memory_space<vmem>>, %arg5: memref<128x128xbf16, #tpu.memory_space<vmem>>, %arg6: memref<1x128xf32, #tpu.memory_space<vmem>>, %arg7: memref<320x128xbf16, #tpu.memory_space<vmem>>, %arg8: memref<1x128xf32, #tpu.memory_space<vmem>>, %arg9: memref<128x128xbf16, #tpu.memory_space<vmem>>, %arg10: memref<1x128xf32, #tpu.memory_space<vmem>>, %arg11: memref<32x128xf32, #tpu.memory_space<vmem>>, %arg12: memref<32x128xf32, #tpu.memory_space<vmem>>) attributes {dimension_semantics = [#tpu.dimension_semantics<parallel>], iteration_bounds = array<i64: 1>, scalar_prefetch = 0 : i64, scratch_operands = 0 : i64, tpu.core_type = #tpu.core_type<tc>, window_params = [{transform_indices = @transform_0, window_bounds = array<i64: 32, 320>}, {transform_indices = @transform_1, window_bounds = array<i64: 32, 320>}, {pipeline_mode = #tpu.pipeline_mode<synchronous>, transform_indices = @transform_2, window_bounds = array<i64: 320, 128>}, {pipeline_mode = #tpu.pipeline_mode<synchronous>, transform_indices = @transform_3, window_bounds = array<i64: 1, 128>}, {pipeline_mode = #tpu.pipeline_mode<synchronous>, transform_indices = @transform_4, window_bounds = array<i64: 128, 128>}, {pipeline_mode = #tpu.pipeline_mode<synchronous>, transform_indices = @transform_5, window_bounds = array<i64: 1, 128>}, {pipeline_mode = #tpu.pipeline_mode<synchronous>, transform_indices = @transform_6, window_bounds = array<i64: 320, 128>}, {pipeline_mode = #tpu.pipeline_mode<synchronous>, transform_indices = @transform_7, window_bounds = array<i64: 1, 128>}, {pipeline_mode = #tpu.pipeline_mode<synchronous>, transform_indices = @transform_8, window_bounds = array<i64: 128, 128>}, {pipeline_mode = #tpu.pipeline_mode<synchronous>, transform_indices = @transform_9, window_bounds = array<i64: 1, 128>}, {transform_indices = @transform_10, window_bounds = array<i64: 32, 128>}, {transform_indices = @transform_11, window_bounds = array<i64: 32, 128>}]} {
    %c0 = arith.constant 0 : index
    %c0_0 = arith.constant 0 : index
    %0 = vector.load %arg1[%c0, %c0_0] : memref<32x320xf32, #tpu.memory_space<vmem>>, vector<32x320xf32>
    %1 = arith.truncf %0 : vector<32x320xf32> to vector<32x320xbf16>
    %c0_1 = arith.constant 0 : index
    %c0_2 = arith.constant 0 : index
    %2 = vector.load %arg3[%c0_1, %c0_2] : memref<320x128xbf16, #tpu.memory_space<vmem>>, vector<320x128xbf16>
    %c0_3 = arith.constant 0 : index
    %c0_4 = arith.constant 0 : index
    %3 = vector.load %arg5[%c0_3, %c0_4] : memref<128x128xbf16, #tpu.memory_space<vmem>>, vector<128x128xbf16>
    %cst = arith.constant dense<0.000000e+00> : vector<32x128xf32>
    %4 = tpu.matmul %1, %2, %cst {dimension_numbers = #tpu.dot_dimension_numbers<[1], [0], [0], [1], [0, 0, 1, 1], [], []>} : vector<32x320xbf16>, vector<320x128xbf16>, vector<32x128xf32> -> vector<32x128xf32>
    %c0_5 = arith.constant 0 : index
    %c0_6 = arith.constant 0 : index
    %5 = vector.load %arg4[%c0_5, %c0_6] : memref<1x128xf32, #tpu.memory_space<vmem>>, vector<1x128xf32>
    %6 = vector.broadcast %5 : vector<1x128xf32> to vector<32x128xf32>
    %7 = arith.addf %4, %6 : vector<32x128xf32>
    %cst_7 = arith.constant 0.000000e+00 : f32
    %8 = vector.broadcast %cst_7 : f32 to vector<32x128xf32>
    %9 = arith.maximumf %7, %8 : vector<32x128xf32>
    %10 = arith.truncf %9 : vector<32x128xf32> to vector<32x128xbf16>
    %cst_8 = arith.constant dense<0.000000e+00> : vector<32x128xf32>
    %11 = tpu.matmul %10, %3, %cst_8 {dimension_numbers = #tpu.dot_dimension_numbers<[1], [0], [0], [1], [0, 0, 1, 1], [], []>} : vector<32x128xbf16>, vector<128x128xbf16>, vector<32x128xf32> -> vector<32x128xf32>
    %c0_9 = arith.constant 0 : index
    %c0_10 = arith.constant 0 : index
    %12 = vector.load %arg6[%c0_9, %c0_10] : memref<1x128xf32, #tpu.memory_space<vmem>>, vector<1x128xf32>
    %13 = vector.broadcast %12 : vector<1x128xf32> to vector<32x128xf32>
    %14 = arith.addf %11, %13 : vector<32x128xf32>
    %15 = arith.mulf %14, %14 : vector<32x128xf32>
    %cst_11 = arith.constant dense<0.000000e+00> : vector<32xf32>
    %16 = vector.multi_reduction <add>, %15, %cst_11 [1] : vector<32x128xf32> to vector<32xf32>
    %17 = vector.shape_cast %16 : vector<32xf32> to vector<32x1xf32>
    %cst_12 = arith.constant 1.000000e-24 : f32
    %18 = vector.broadcast %cst_12 : f32 to vector<32x1xf32>
    %19 = arith.maximumf %17, %18 : vector<32x1xf32>
    %20 = math.rsqrt %19 : vector<32x1xf32>
    %21 = vector.broadcast %20 : vector<32x1xf32> to vector<32x128xf32>
    %22 = arith.mulf %14, %21 : vector<32x128xf32>
    %c0_13 = arith.constant 0 : index
    %c0_14 = arith.constant 0 : index
    %23 = vector.load %arg11[%c0_13, %c0_14] : memref<32x128xf32, #tpu.memory_space<vmem>>, vector<32x128xf32>
    tpu.vector_store %arg11[%c0_13, %c0_14], %22 {strides = array<i32>} : memref<32x128xf32, #tpu.memory_space<vmem>>, vector<32x128xf32>,
    %c0_15 = arith.constant 0 : index
    %c0_16 = arith.constant 0 : index
    %24 = vector.load %arg2[%c0_15, %c0_16] : memref<32x320xf32, #tpu.memory_space<vmem>>, vector<32x320xf32>
    %25 = arith.truncf %24 : vector<32x320xf32> to vector<32x320xbf16>
    %c0_17 = arith.constant 0 : index
    %c0_18 = arith.constant 0 : index
    %26 = vector.load %arg7[%c0_17, %c0_18] : memref<320x128xbf16, #tpu.memory_space<vmem>>, vector<320x128xbf16>
    %c0_19 = arith.constant 0 : index
    %c0_20 = arith.constant 0 : index
    %27 = vector.load %arg9[%c0_19, %c0_20] : memref<128x128xbf16, #tpu.memory_space<vmem>>, vector<128x128xbf16>
    %cst_21 = arith.constant dense<0.000000e+00> : vector<32x128xf32>
    %28 = tpu.matmul %25, %26, %cst_21 {dimension_numbers = #tpu.dot_dimension_numbers<[1], [0], [0], [1], [0, 0, 1, 1], [], []>} : vector<32x320xbf16>, vector<320x128xbf16>, vector<32x128xf32> -> vector<32x128xf32>
    %c0_22 = arith.constant 0 : index
    %c0_23 = arith.constant 0 : index
    %29 = vector.load %arg8[%c0_22, %c0_23] : memref<1x128xf32, #tpu.memory_space<vmem>>, vector<1x128xf32>
    %30 = vector.broadcast %29 : vector<1x128xf32> to vector<32x128xf32>
    %31 = arith.addf %28, %30 : vector<32x128xf32>
    %cst_24 = arith.constant 0.000000e+00 : f32
    %32 = vector.broadcast %cst_24 : f32 to vector<32x128xf32>
    %33 = arith.maximumf %31, %32 : vector<32x128xf32>
    %34 = arith.truncf %33 : vector<32x128xf32> to vector<32x128xbf16>
    %cst_25 = arith.constant dense<0.000000e+00> : vector<32x128xf32>
    %35 = tpu.matmul %34, %27, %cst_25 {dimension_numbers = #tpu.dot_dimension_numbers<[1], [0], [0], [1], [0, 0, 1, 1], [], []>} : vector<32x128xbf16>, vector<128x128xbf16>, vector<32x128xf32> -> vector<32x128xf32>
    %c0_26 = arith.constant 0 : index
    %c0_27 = arith.constant 0 : index
    %36 = vector.load %arg10[%c0_26, %c0_27] : memref<1x128xf32, #tpu.memory_space<vmem>>, vector<1x128xf32>
    %37 = vector.broadcast %36 : vector<1x128xf32> to vector<32x128xf32>
    %38 = arith.addf %35, %37 : vector<32x128xf32>
    %39 = arith.mulf %38, %38 : vector<32x128xf32>
    %cst_28 = arith.constant dense<0.000000e+00> : vector<32xf32>
    %40 = vector.multi_reduction <add>, %39, %cst_28 [1] : vector<32x128xf32> to vector<32xf32>
    %41 = vector.shape_cast %40 : vector<32xf32> to vector<32x1xf32>
    %cst_29 = arith.constant 1.000000e-24 : f32
    %42 = vector.broadcast %cst_29 : f32 to vector<32x1xf32>
    %43 = arith.maximumf %41, %42 : vector<32x1xf32>
    %44 = math.rsqrt %43 : vector<32x1xf32>
    %45 = vector.broadcast %44 : vector<32x1xf32> to vector<32x128xf32>
    %46 = arith.mulf %38, %45 : vector<32x128xf32>
    %c0_30 = arith.constant 0 : index
    %c0_31 = arith.constant 0 : index
    %47 = vector.load %arg12[%c0_30, %c0_31] : memref<32x128xf32, #tpu.memory_space<vmem>>, vector<32x128xf32>
    tpu.vector_store %arg12[%c0_30, %c0_31], %46 {strides = array<i32>} : memref<32x128xf32, #tpu.memory_space<vmem>>, vector<32x128xf32>,
    return
  }
  func.func @transform_0(%arg0: i32) -> (i32, i32) {
    %c0_i32 = arith.constant 0 : i32
    %c0_i32_0 = arith.constant 0 : i32
    return %arg0, %c0_i32 : i32, i32
  }
  func.func @transform_1(%arg0: i32) -> (i32, i32) {
    %c0_i32 = arith.constant 0 : i32
    %c0_i32_0 = arith.constant 0 : i32
    return %arg0, %c0_i32 : i32, i32
  }
  func.func @transform_2(%arg0: i32) -> (i32, i32) {
    %c0_i32 = arith.constant 0 : i32
    %c0_i32_0 = arith.constant 0 : i32
    %c0_i32_1 = arith.constant 0 : i32
    return %c0_i32, %c0_i32_0 : i32, i32
  }
  func.func @transform_3(%arg0: i32) -> (i32, i32) {
    %c0_i32 = arith.constant 0 : i32
    %c0_i32_0 = arith.constant 0 : i32
    %c0_i32_1 = arith.constant 0 : i32
    return %c0_i32, %c0_i32_0 : i32, i32
  }
  func.func @transform_4(%arg0: i32) -> (i32, i32) {
    %c0_i32 = arith.constant 0 : i32
    %c0_i32_0 = arith.constant 0 : i32
    %c0_i32_1 = arith.constant 0 : i32
    return %c0_i32, %c0_i32_0 : i32, i32
  }
  func.func @transform_5(%arg0: i32) -> (i32, i32) {
    %c0_i32 = arith.constant 0 : i32
    %c0_i32_0 = arith.constant 0 : i32
    %c0_i32_1 = arith.constant 0 : i32
    return %c0_i32, %c0_i32_0 : i32, i32
  }
  func.func @transform_6(%arg0: i32) -> (i32, i32) {
    %c0_i32 = arith.constant 0 : i32
    %c0_i32_0 = arith.constant 0 : i32
    %c0_i32_1 = arith.constant 0 : i32
    return %c0_i32, %c0_i32_0 : i32, i32
  }
  func.func @transform_7(%arg0: i32) -> (i32, i32) {
    %c0_i32 = arith.constant 0 : i32
    %c0_i32_0 = arith.constant 0 : i32
    %c0_i32_1 = arith.constant 0 : i32
    return %c0_i32, %c0_i32_0 : i32, i32
  }
  func.func @transform_8(%arg0: i32) -> (i32, i32) {
    %c0_i32 = arith.constant 0 : i32
    %c0_i32_0 = arith.constant 0 : i32
    %c0_i32_1 = arith.constant 0 : i32
    return %c0_i32, %c0_i32_0 : i32, i32
  }
  func.func @transform_9(%arg0: i32) -> (i32, i32) {
    %c0_i32 = arith.constant 0 : i32
    %c0_i32_0 = arith.constant 0 : i32
    %c0_i32_1 = arith.constant 0 : i32
    return %c0_i32, %c0_i32_0 : i32, i32
  }
  func.func @transform_10(%arg0: i32) -> (i32, i32) {
    %c0_i32 = arith.constant 0 : i32
    %c0_i32_0 = arith.constant 0 : i32
    return %arg0, %c0_i32 : i32, i32
  }
  func.func @transform_11(%arg0: i32) -> (i32, i32) {
    %c0_i32 = arith.constant 0 : i32
    %c0_i32_0 = arith.constant 0 : i32
    return %arg0, %c0_i32 : i32, i32
  }
}

</mosaic_0001>

<llo_original>
// kernel: tpu_custom_call.1
$region0: #{tpu_custom_call.1}
  #allocation0 [shape = 'u32[]', space=smem, size = 0x4, offset = 0x4, fixed_abs, tag = 'smem constant byte address 0x4 - core index']
  #allocation1 [shape = 'u32[144,128]{1,0:T(1,128)}', space=vmem, size = 0x12000, scoped, tag = 'internal scratch']
  %s0 = inlined_call_operand.hbm [shape: f32[32,320], index: 0, kind: input, shape index: {}]
  %s1 = inlined_call_operand.hbm [shape: f32[32,320], index: 1, kind: input, shape index: {}]
  %s2 = inlined_call_operand.hbm [shape: bf16[320,128], index: 2, kind: input, shape index: {}]
  %s3 = inlined_call_operand.vmem [shape: f32[1,128], index: 3, kind: input, shape index: {}]
  %s4 = inlined_call_operand.hbm [shape: bf16[128,128], index: 4, kind: input, shape index: {}]
  %s5 = inlined_call_operand.vmem [shape: f32[1,128], index: 5, kind: input, shape index: {}]
  %s6 = inlined_call_operand.hbm [shape: bf16[320,128], index: 6, kind: input, shape index: {}]
  %s7 = inlined_call_operand.vmem [shape: f32[1,128], index: 7, kind: input, shape index: {}]
  %s8 = inlined_call_operand.hbm [shape: bf16[128,128], index: 8, kind: input, shape index: {}]
  %s9 = inlined_call_operand.vmem [shape: f32[1,128], index: 9, kind: input, shape index: {}]
  %s10 = inlined_call_operand.hbm [shape: f32[32,128], index: 10, kind: output, shape index: {0}]
  %s11 = inlined_call_operand.hbm [shape: f32[32,128], index: 11, kind: output, shape index: {1}]
  %12 = xla_tuple %s10, %s11
  %s13 = sld [smem:[#allocation0]]
  $region82: #{tpu_custom_call.1} parent=0
    _
  %s15 = ssub.s32 1, %s13
  %s16 = scalar_select 0, %s15, %s13
  $region1: #{tpu_custom_call.1} parent=0
    #allocation2 [shape = 'u8[49152]{0}', space=vmem, size = 0xc000, scoped, tag = 'input window, operand 0, single buffered']
    #allocation3 [shape = 's32[1]{0}', space=sflag, size = 0x4, scoped, tag = 'scoped memory for tpu_custom_call.1']
    #allocation4 [shape = 's32[1]{0}', space=sflag, size = 0x4, scoped, tag = 'scoped memory for tpu_custom_call.1']
    #allocation5 [shape = 'u8[49152]{0}', space=vmem, size = 0xc000, scoped, tag = 'input window, operand 1, single buffered']
    #allocation6 [shape = 's32[1]{0}', space=sflag, size = 0x4, scoped, tag = 'scoped memory for tpu_custom_call.1']
    #allocation7 [shape = 'u8[81920]{0}', space=vmem, size = 0x14000, scoped, tag = 'input window, operand 2, single buffered']
    #allocation8 [shape = 'u8[32768]{0}', space=vmem, size = 0x8000, scoped, tag = 'input window, operand 4, single buffered']
    #allocation9 [shape = 's32[1]{0}', space=sflag, size = 0x4, scoped, tag = 'scoped memory for tpu_custom_call.1']
    #allocation10 [shape = 'u8[81920]{0}', space=vmem, size = 0x14000, scoped, tag = 'input window, operand 6, single buffered']
    #allocation11 [shape = 'u8[32768]{0}', space=vmem, size = 0x8000, scoped, tag = 'input window, operand 8, single buffered']
    #allocation12 [shape = 's32[1]{0}', space=sflag, size = 0x4, scoped, tag = 'scoped memory for tpu_custom_call.1']
    #allocation13 [shape = 'u8[16384]{0}', space=vmem, size = 0x4000, scoped, tag = 'output window, operand 0, single buffered']
    #allocation14 [shape = 'u8[16384]{0}', space=vmem, size = 0x4000, scoped, tag = 'output window, operand 1, single buffered']
    #allocation15 [shape = 's32[1]{0}', space=sflag, size = 0x4, scoped, tag = 'scoped memory for tpu_custom_call.1']
    %17 = vsyncpa [#allocation3], 0
    %18 = vsyncpa [#allocation6], 0
    %19 = vsyncpa [#allocation9], 0
    %20 = vsyncpa [#allocation12], 0
    %21 = vsyncpa [#allocation4], 0
    %22 = vsyncpa [#allocation15], 0
    // Predicated region
    $region2: #{tpu_custom_call.1} parent=1 // pred_check
      _
    $region3: #{tpu_custom_call.1} parent=1 // pred_check_branch
      %24 = sbr.rel (0) target = $region5
    $region4: #{tpu_custom_call.1} parent=1 // pred_region
      %s26 = ssub.s32 1536, 1536
      %27 = vsyncadd [#allocation3], %s26
      %s28 = sshll.u32 [#allocation2], 4
      %s29 = int_to_ptr.vmem [resolvable:$true] %s28
      %34 = dma.hbm_to_vmem [thread:$0]  %s0, 1536, %s29, [#allocation3], 384, 384, 24
    $region5: #{tpu_custom_call.1} parent=1 // pred_fallthru
      _
    // Predicated region
    $region6: #{tpu_custom_call.1} parent=1 // pred_check
      _
    $region7: #{tpu_custom_call.1} parent=1 // pred_check_branch
      %36 = sbr.rel (0) target = $region9
    $region8: #{tpu_custom_call.1} parent=1 // pred_region
      %s38 = ssub.s32 1536, 1536
      %39 = vsyncadd [#allocation6], %s38
      %s40 = sshll.u32 [#allocation5], 4
      %s41 = int_to_ptr.vmem [resolvable:$true] %s40
      %46 = dma.hbm_to_vmem [thread:$0]  %s1, 1536, %s41, [#allocation6], 384, 384, 24
    $region9: #{tpu_custom_call.1} parent=1 // pred_fallthru
      _
    // Predicated region
    $region10: #{tpu_custom_call.1} parent=1 // pred_check
      _
    $region11: #{tpu_custom_call.1} parent=1 // pred_check_branch
      %48 = sbr.rel (0) target = $region13
    $region12: #{tpu_custom_call.1} parent=1 // pred_region
      %s50 = ssub.s32 2560, 2560
      %51 = vsyncadd [#allocation6], %s50
      %s52 = sshll.u32 [#allocation7], 4
      %s53 = int_to_ptr.vmem [resolvable:$true] %s52
      %58 = dma.hbm_to_vmem [thread:$0]  %s2, 2560, %s53, [#allocation6], 64, 64, 4
    $region13: #{tpu_custom_call.1} parent=1 // pred_fallthru
      _
    // Predicated region
    $region14: #{tpu_custom_call.1} parent=1 // pred_check
      _
    $region15: #{tpu_custom_call.1} parent=1 // pred_check_branch
      %60 = sbr.rel (0) target = $region17
    $region16: #{tpu_custom_call.1} parent=1 // pred_region
      _
    $region17: #{tpu_custom_call.1} parent=1 // pred_fallthru
      _
    // Predicated region
    $region18: #{tpu_custom_call.1} parent=1 // pred_check
      _
    $region19: #{tpu_custom_call.1} parent=1 // pred_check_branch
      %62 = sbr.rel (0) target = $region21
    $region20: #{tpu_custom_call.1} parent=1 // pred_region
      %s64 = ssub.s32 1024, 1024
      %65 = vsyncadd [#allocation9], %s64
      %s66 = sshll.u32 [#allocation8], 4
      %s67 = int_to_ptr.vmem [resolvable:$true] %s66
      %72 = dma.hbm_to_vmem [thread:$0]  %s4, 1024, %s67, [#allocation9], 64, 64, 4
    $region21: #{tpu_custom_call.1} parent=1 // pred_fallthru
      _
    // Predicated region
    $region22: #{tpu_custom_call.1} parent=1 // pred_check
      _
    $region23: #{tpu_custom_call.1} parent=1 // pred_check_branch
      %74 = sbr.rel (0) target = $region25
    $region24: #{tpu_custom_call.1} parent=1 // pred_region
      _
    $region25: #{tpu_custom_call.1} parent=1 // pred_fallthru
      _
    // Predicated region
    $region26: #{tpu_custom_call.1} parent=1 // pred_check
      _
    $region27: #{tpu_custom_call.1} parent=1 // pred_check_branch
      %76 = sbr.rel (0) target = $region29
    $region28: #{tpu_custom_call.1} parent=1 // pred_region
      %s78 = ssub.s32 2560, 2560
      %79 = vsyncadd [#allocation9], %s78
      %s80 = sshll.u32 [#allocation10], 4
      %s81 = int_to_ptr.vmem [resolvable:$true] %s80
      %86 = dma.hbm_to_vmem [thread:$0]  %s6, 2560, %s81, [#allocation9], 64, 64, 4
    $region29: #{tpu_custom_call.1} parent=1 // pred_fallthru
      _
    // Predicated region
    $region30: #{tpu_custom_call.1} parent=1 // pred_check
      _
    $region31: #{tpu_custom_call.1} parent=1 // pred_check_branch
      %88 = sbr.rel (0) target = $region33
    $region32: #{tpu_custom_call.1} parent=1 // pred_region
      _
    $region33: #{tpu_custom_call.1} parent=1 // pred_fallthru
      _
    // Predicated region
    $region34: #{tpu_custom_call.1} parent=1 // pred_check
      _
    $region35: #{tpu_custom_call.1} parent=1 // pred_check_branch
      %90 = sbr.rel (0) target = $region37
    $region36: #{tpu_custom_call.1} parent=1 // pred_region
      %s92 = ssub.s32 1024, 1024
      %93 = vsyncadd [#allocation12], %s92
      %s94 = sshll.u32 [#allocation11], 4
      %s95 = int_to_ptr.vmem [resolvable:$true] %s94
      %100 = dma.hbm_to_vmem [thread:$0]  %s8, 1024, %s95, [#allocation12], 64, 64, 4
    $region37: #{tpu_custom_call.1} parent=1 // pred_fallthru
      _
    // Predicated region
    $region38: #{tpu_custom_call.1} parent=1 // pred_check
      _
    $region39: #{tpu_custom_call.1} parent=1 // pred_check_branch
      %102 = sbr.rel (0) target = $region41
    $region40: #{tpu_custom_call.1} parent=1 // pred_region
      _
    $region41: #{tpu_custom_call.1} parent=1 // pred_fallthru
      _
    // Predicated region
    $region42: #{tpu_custom_call.1} parent=1 // pred_check
      _
    $region43: #{tpu_custom_call.1} parent=1 // pred_check_branch
      %104 = sbr.rel (0) target = $region45
    $region44: #{tpu_custom_call.1} parent=1 // pred_region
      %105 = dma.done [#allocation3], 1536
    $region45: #{tpu_custom_call.1} parent=1 // pred_fallthru
      _
    // Predicated region
    $region46: #{tpu_custom_call.1} parent=1 // pred_check
      _
    $region47: #{tpu_custom_call.1} parent=1 // pred_check_branch
      %107 = sbr.rel (0) target = $region49
    $region48: #{tpu_custom_call.1} parent=1 // pred_region
      %108 = dma.done [#allocation6], 1536
    $region49: #{tpu_custom_call.1} parent=1 // pred_fallthru
      _
    // Predicated region
    $region50: #{tpu_custom_call.1} parent=1 // pred_check
      _
    $region51: #{tpu_custom_call.1} parent=1 // pred_check_branch
      %110 = sbr.rel (0) target = $region53
    $region52: #{tpu_custom_call.1} parent=1 // pred_region
      %111 = dma.done [#allocation6], 2560
    $region53: #{tpu_custom_call.1} parent=1 // pred_fallthru
      _
    // Predicated region
    $region54: #{tpu_custom_call.1} parent=1 // pred_check
      _
    $region55: #{tpu_custom_call.1} parent=1 // pred_check_branch
      %113 = sbr.rel (0) target = $region57
    $region56: #{tpu_custom_call.1} parent=1 // pred_region
      %114 = dma.done [#allocation9], 1024
    $region57: #{tpu_custom_call.1} parent=1 // pred_fallthru
      _
    // Predicated region
    $region58: #{tpu_custom_call.1} parent=1 // pred_check
      _
    $region59: #{tpu_custom_call.1} parent=1 // pred_check_branch
      %116 = sbr.rel (0) target = $region61
    $region60: #{tpu_custom_call.1} parent=1 // pred_region
      %117 = dma.done [#allocation9], 2560
    $region61: #{tpu_custom_call.1} parent=1 // pred_fallthru
      _
    // Predicated region
    $region62: #{tpu_custom_call.1} parent=1 // pred_check
      _
    $region63: #{tpu_custom_call.1} parent=1 // pred_check_branch
      %119 = sbr.rel (0) target = $region65
    $region64: #{tpu_custom_call.1} parent=1 // pred_region
      %120 = dma.done [#allocation12], 1024
    $region65: #{tpu_custom_call.1} parent=1 // pred_fallthru
      _
    %v122 = vld [vmem:[#allocation2] sm:$0xff]
    %v123 = vld [vmem:[#allocation2 + $0x8] sm:$0xff]
    %v124 = vld [vmem:[#allocation2 + $0x10] sm:$0xff]
    %v125 = vld [vmem:[#allocation2 + $0x18] sm:$0xff]
    %v126 = vld [vmem:[#allocation2 + $0x20] sm:$0xff]
    %v127 = vld [vmem:[#allocation2 + $0x28] sm:$0xff]
    %v128 = vld [vmem:[#allocation2 + $0x30] sm:$0xff]
    %v129 = vld [vmem:[#allocation2 + $0x38] sm:$0xff]
    %v130 = vld [vmem:[#allocation2 + $0x40] sm:$0xff]
    %v131 = vld [vmem:[#allocation2 + $0x48] sm:$0xff]
    %v132 = vld [vmem:[#allocation2 + $0x50] sm:$0xff]
    %v133 = vld [vmem:[#allocation2 + $0x58] sm:$0xff]
    %v134 = vpack.c.bf16 %v125, %v122
    %v135 = vpack.c.bf16 %v126, %v123
    %v136 = vpack.c.bf16 %v127, %v124
    %v137 = vpack.c.bf16 %v131, %v128
    %v138 = vpack.c.bf16 %v132, %v129
    %v139 = vpack.c.bf16 %v133, %v130
    %v140 = vld [vmem:[#allocation7] sm:$0xf]
    %v141 = vld [vmem:[#allocation7 + $0x4] sm:$0xf]
    %v142 = vld [vmem:[#allocation7 + $0x8] sm:$0xf]
    %v143 = vld [vmem:[#allocation7 + $0xc] sm:$0xf]
    %v144 = vld [vmem:[#allocation7 + $0x10] sm:$0xf]
    %v145 = vld [vmem:[#allocation7 + $0x14] sm:$0xf]
    %v146 = vld [vmem:[#allocation7 + $0x18] sm:$0xf]
    %v147 = vld [vmem:[#allocation7 + $0x1c] sm:$0xf]
    %v148 = vld [vmem:[#allocation7 + $0x20] sm:$0xf]
    %v149 = vld [vmem:[#allocation7 + $0x24] sm:$0xf]
    %v150 = vld [vmem:[#allocation7 + $0x28] sm:$0xf]
    %v151 = vld [vmem:[#allocation7 + $0x2c] sm:$0xf]
    %v152 = vld [vmem:[#allocation7 + $0x30] sm:$0xf]
    %v153 = vld [vmem:[#allocation7 + $0x34] sm:$0xf]
    %v154 = vld [vmem:[#allocation7 + $0x38] sm:$0xf]
    %v155 = vld [vmem:[#allocation7 + $0x3c] sm:$0xf]
    %v156 = vld [vmem:[#allocation7 + $0x40] sm:$0xf]
    %v157 = vld [vmem:[#allocation7 + $0x44] sm:$0xf]
    %v158 = vld [vmem:[#allocation7 + $0x48] sm:$0xf]
    %v159 = vld [vmem:[#allocation7 + $0x4c] sm:$0xf]
    %v160 = vld [vmem:[#allocation7 + $0x50] sm:$0xf]
    %v161 = vld [vmem:[#allocation7 + $0x54] sm:$0xf]
    %v162 = vld [vmem:[#allocation7 + $0x58] sm:$0xf]
    %v163 = vld [vmem:[#allocation7 + $0x5c] sm:$0xf]
    %v164 = vld [vmem:[#allocation7 + $0x60] sm:$0xf]
    %v165 = vld [vmem:[#allocation7 + $0x64] sm:$0xf]
    %v166 = vld [vmem:[#allocation7 + $0x68] sm:$0xf]
    %v167 = vld [vmem:[#allocation7 + $0x6c] sm:$0xf]
    %v168 = vld [vmem:[#allocation7 + $0x70] sm:$0xf]
    %v169 = vld [vmem:[#allocation7 + $0x74] sm:$0xf]
    %v170 = vld [vmem:[#allocation7 + $0x78] sm:$0xf]
    %v171 = vld [vmem:[#allocation7 + $0x7c] sm:$0xf]
    %v172 = vld [vmem:[#allocation7 + $0x80] sm:$0xf]
    %v173 = vld [vmem:[#allocation7 + $0x84] sm:$0xf]
    %v174 = vld [vmem:[#allocation7 + $0x88] sm:$0xf]
    %v175 = vld [vmem:[#allocation7 + $0x8c] sm:$0xf]
    %v176 = vld [vmem:[#allocation7 + $0x90] sm:$0xf]
    %v177 = vld [vmem:[#allocation7 + $0x94] sm:$0xf]
    %v178 = vld [vmem:[#allocation7 + $0x98] sm:$0xf]
    %v179 = vld [vmem:[#allocation7 + $0x9c] sm:$0xf]
    %v180 = vld [vmem:[#allocation8] sm:$0xf]
    %v181 = vld [vmem:[#allocation8 + $0x4] sm:$0xf]
    %v182 = vld [vmem:[#allocation8 + $0x8] sm:$0xf]
    %v183 = vld [vmem:[#allocation8 + $0xc] sm:$0xf]
    %v184 = vld [vmem:[#allocation8 + $0x10] sm:$0xf]
    %v185 = vld [vmem:[#allocation8 + $0x14] sm:$0xf]
    %v186 = vld [vmem:[#allocation8 + $0x18] sm:$0xf]
    %v187 = vld [vmem:[#allocation8 + $0x1c] sm:$0xf]
    %v188 = vld [vmem:[#allocation8 + $0x20] sm:$0xf]
    %v189 = vld [vmem:[#allocation8 + $0x24] sm:$0xf]
    %v190 = vld [vmem:[#allocation8 + $0x28] sm:$0xf]
    %v191 = vld [vmem:[#allocation8 + $0x2c] sm:$0xf]
    %v192 = vld [vmem:[#allocation8 + $0x30] sm:$0xf]
    %v193 = vld [vmem:[#allocation8 + $0x34] sm:$0xf]
    %v194 = vld [vmem:[#allocation8 + $0x38] sm:$0xf]
    %v195 = vld [vmem:[#allocation8 + $0x3c] sm:$0xf]
    %v196 = vld [vmem:[%s3] sm:$0x1]
    %v198 = vlaneseq
    %v199 = vshrl.u32 %v198, 7
    %v200 = vsub.s32 0, %v199
    %v201 = vrot.slane %v196, %v200
    %v243 = vunpack.c.l.b16 %v140
    %v244 = vunpack.c.l.b16 %v141
    %v245 = vunpack.c.l.b16 %v142
    %v246 = vunpack.c.l.b16 %v143
    %v247 = vunpack.c.l.b16 %v144
    %v248 = vunpack.c.l.b16 %v145
    %v249 = vunpack.c.l.b16 %v146
    %v250 = vunpack.c.l.b16 %v147
    %v251 = vunpack.c.l.b16 %v148
    %v252 = vunpack.c.l.b16 %v149
    %v253 = vunpack.c.l.b16 %v150
    %v254 = vunpack.c.l.b16 %v151
    %v255 = vunpack.c.l.b16 %v152
    %v256 = vunpack.c.l.b16 %v153
    %v257 = vunpack.c.l.b16 %v154
    %v258 = vunpack.c.l.b16 %v155
    %v259 = vunpack.c.l.b16 %v156
    %v260 = vunpack.c.l.b16 %v157
    %v261 = vunpack.c.l.b16 %v158
    %v262 = vunpack.c.l.b16 %v159
    %v263 = vunpack.c.l.b16 %v160
    %v264 = vunpack.c.l.b16 %v161
    %v265 = vunpack.c.l.b16 %v162
    %v266 = vunpack.c.l.b16 %v163
    %v267 = vunpack.c.l.b16 %v164
    %v268 = vunpack.c.l.b16 %v165
    %v269 = vunpack.c.l.b16 %v166
    %v270 = vunpack.c.l.b16 %v167
    %v271 = vunpack.c.l.b16 %v168
    %v272 = vunpack.c.l.b16 %v169
    %v273 = vunpack.c.l.b16 %v170
    %v274 = vunpack.c.l.b16 %v171
    %v275 = vunpack.c.l.b16 %v172
    %v276 = vunpack.c.l.b16 %v173
    %v277 = vunpack.c.l.b16 %v174
    %v278 = vunpack.c.l.b16 %v175
    %v279 = vunpack.c.l.b16 %v176
    %v280 = vunpack.c.l.b16 %v177
    %v281 = vunpack.c.l.b16 %v178
    %v282 = vunpack.c.l.b16 %v179
    %v283 = vpack.c.b16 %v244, %v243
    %v284 = vpack.c.b16 %v246, %v245
    %v285 = vpack.c.b16 %v248, %v247
    %v286 = vpack.c.b16 %v250, %v249
    %v287 = vpack.c.b16 %v252, %v251
    %v288 = vpack.c.b16 %v254, %v253
    %v289 = vpack.c.b16 %v256, %v255
    %v290 = vpack.c.b16 %v258, %v257
    %v291 = vpack.c.b16 %v260, %v259
    %v292 = vpack.c.b16 %v262, %v261
    %v293 = vpack.c.b16 %v264, %v263
    %v294 = vpack.c.b16 %v266, %v265
    %v295 = vpack.c.b16 %v268, %v267
    %v296 = vpack.c.b16 %v270, %v269
    %v297 = vpack.c.b16 %v272, %v271
    %v298 = vpack.c.b16 %v274, %v273
    %v299 = vpack.c.b16 %v276, %v275
    %v300 = vpack.c.b16 %v278, %v277
    %v301 = vpack.c.b16 %v280, %v279
    %v302 = vpack.c.b16 %v282, %v281
    %vm323 = vcmask 523264
    %v325 = vsel %vm323, %v136, 0
    %v328 = vsel %vm323, %v139, 0
    %330 = vmatprep.subr.bf16.mxu0 0
    %331 = vmatpush1.bf16.msra.mxu0 %v283
    %332 = vmatprep.subr.bf16.mxu0 0
    %333 = vmatpush1.bf16.msra.mxu0 %v284
    %334 = vmatprep.subr.bf16.mxu0 0
    %335 = vmatpush1.bf16.msra.mxu0 %v285
    %336 = vmatprep.subr.bf16.mxu0 0
    %337 = vmatpush1.bf16.msra.mxu0 %v286
    %338 = vmatprep.subr.bf16.mxu0 0
    %339 = vmatpush1.bf16.msra.mxu0 %v287
    %340 = vmatprep.subr.bf16.mxu0 0
    %341 = vmatpush1.bf16.msra.mxu0 %v288
    %342 = vmatprep.subr.bf16.mxu0 0
    %343 = vmatpush1.bf16.msra.mxu0 %v289
    %344 = vmatprep.subr.bf16.mxu0 0
    %345 = vmatpush1.bf16.msra.mxu0 %v290
    %346 = vmatprep.subr.bf16.mxu0 0
    %347 = vmatpush1.bf16.msra.mxu0 %v291
    %348 = vmatprep.subr.bf16.mxu0 0
    %349 = vmatpush1.bf16.msra.mxu0 %v292
    %350 = vmatprep.subr.bf16.mxu0 0
    %351 = vmatpush1.bf16.msra.mxu0 %v293
    %352 = vmatprep.subr.bf16.mxu0 0
    %353 = vmatpush1.bf16.msra.mxu0 %v294
    %354 = vmatprep.subr.bf16.mxu0 0
    %355 = vmatpush1.bf16.msra.mxu0 %v295
    %356 = vmatprep.subr.bf16.mxu0 0
    %357 = vmatpush1.bf16.msra.mxu0 %v296
    %358 = vmatprep.subr.bf16.mxu0 0
    %359 = vmatpush1.bf16.msra.mxu0 %v297
    %360 = vmatprep.subr.bf16.mxu0 0
    %361 = vmatpush1.bf16.msra.mxu0 %v298
    %362 = vmatprep.mubr.bf16.mxu0 %v135
    %363 = vmatmul.mubr.bf16.gmra.mrb[0].mxu0 %v134
    %v364 = vpop.f32.mrb[0].mxu0
    %v365 = vadd.f32 %v201, %v364
    %v366 = vpop.f32.mrb[0].mxu0
    %v367 = vpop.f32.mrb[0].mxu0
    %v368 = vadd.f32 %v201, %v367
    %v369 = vpop.f32.mrb[0].mxu0
    %370 = vmatprep.mubr.bf16.mxu0 %v138
    %371 = vmatmul.mubr.bf16.gmra.mrb[0].mxu0 %v137
    %v372 = vpop.f32.mrb[0].mxu0
    %v373 = vadd.f32 %v201, %v372
    %v374 = vpop.f32.mrb[0].mxu0
    %v375 = vpop.f32.mrb[0].mxu0
    %v376 = vadd.f32 %v201, %v375
    %v377 = vpop.f32.mrb[0].mxu0
    %378 = vdwg.mxu0
    %379 = vmatprep.subr.bf16.mxu0 0
    %380 = vmatpush1.bf16.msra.mxu0 %v299
    %381 = vmatprep.subr.bf16.mxu0 0
    %382 = vmatpush1.bf16.msra.mxu0 %v300
    %383 = vmatprep.subr.bf16.mxu0 0
    %384 = vmatpush1.bf16.msra.mxu0 %v301
    %385 = vmatprep.subr.bf16.mxu0 0
    %386 = vmatpush1.bf16.msra.mxu0 %v302
    %387 = vmatprep.subr.bf16.mxu0 0
    %388 = vmatpush1.bf16.msra.mxu0 0
    %389 = vmatprep.subr.bf16.mxu0 0
    %390 = vmatpush1.bf16.msra.mxu0 0
    %391 = vmatprep.subr.bf16.mxu0 0
    %392 = vmatpush1.bf16.msra.mxu0 0
    %393 = vmatprep.subr.bf16.mxu0 0
    %394 = vmatpush1.bf16.msra.mxu0 0
    %395 = vmatprep.subr.bf16.mxu0 0
    %396 = vmatpush1.bf16.msra.mxu0 0
    %397 = vmatprep.subr.bf16.mxu0 0
    %398 = vmatpush1.bf16.msra.mxu0 0
    %399 = vmatprep.subr.bf16.mxu0 0
    %400 = vmatpush1.bf16.msra.mxu0 0
    %401 = vmatprep.subr.bf16.mxu0 0
    %402 = vmatpush1.bf16.msra.mxu0 0
    %403 = vmatprep.subr.bf16.mxu0 0
    %404 = vmatpush1.bf16.msra.mxu0 0
    %405 = vmatprep.subr.bf16.mxu0 0
    %406 = vmatpush1.bf16.msra.mxu0 0
    %407 = vmatprep.subr.bf16.mxu0 0
    %408 = vmatpush1.bf16.msra.mxu0 0
    %409 = vmatprep.subr.bf16.mxu0 0
    %410 = vmatpush1.bf16.msra.mxu0 0
    %411 = vmatprep.mubr.bf16.mxu0 0
    %412 = vmatmul.mubr.bf16.gmra.mrb[0].mxu0 %v325
    %v413 = vpop.f32.mrb[0].mxu0
    %v414 = vadd.f32 %v365, %v413
    %v415 = vpop.f32.mrb[0].mxu0
    %v416 = vpop.f32.mrb[0].mxu0
    %v417 = vadd.f32 %v368, %v416
    %v418 = vpop.f32.mrb[0].mxu0
    %419 = vmatprep.mubr.bf16.mxu0 0
    %420 = vmatmul.mubr.bf16.gmra.mrb[0].mxu0 %v328
    %v421 = vpop.f32.mrb[0].mxu0
    %v422 = vadd.f32 %v373, %v421
    %v423 = vpop.f32.mrb[0].mxu0
    %v424 = vpop.f32.mrb[0].mxu0
    %v425 = vadd.f32 %v376, %v424
    %v426 = vpop.f32.mrb[0].mxu0
    %427 = vdwg.mxu0
    %v428 = vmax.f32 %v414, 0.0
    %v429 = vmax.f32 %v417, 0.0
    %v430 = vmax.f32 %v422, 0.0
    %v431 = vmax.f32 %v425, 0.0
    %v432 = vpack.c.bf16 %v429, %v428
    %v433 = vpack.c.bf16 %v431, %v430
    %v434 = vld [vmem:[%s5] sm:$0x1]
    %v436 = vlaneseq
    %v437 = vshrl.u32 %v436, 7
    %v438 = vsub.s32 0, %v437
    %v439 = vrot.slane %v434, %v438
    %v457 = vunpack.c.l.b16 %v180
    %v458 = vunpack.c.l.b16 %v181
    %v459 = vunpack.c.l.b16 %v182
    %v460 = vunpack.c.l.b16 %v183
    %v461 = vunpack.c.l.b16 %v184
    %v462 = vunpack.c.l.b16 %v185
    %v463 = vunpack.c.l.b16 %v186
    %v464 = vunpack.c.l.b16 %v187
    %v465 = vunpack.c.l.b16 %v188
    %v466 = vunpack.c.l.b16 %v189
    %v467 = vunpack.c.l.b16 %v190
    %v468 = vunpack.c.l.b16 %v191
    %v469 = vunpack.c.l.b16 %v192
    %v470 = vunpack.c.l.b16 %v193
    %v471 = vunpack.c.l.b16 %v194
    %v472 = vunpack.c.l.b16 %v195
    %v473 = vpack.c.b16 %v458, %v457
    %v474 = vpack.c.b16 %v460, %v459
    %v475 = vpack.c.b16 %v462, %v461
    %v476 = vpack.c.b16 %v464, %v463
    %v477 = vpack.c.b16 %v466, %v465
    %v478 = vpack.c.b16 %v468, %v467
    %v479 = vpack.c.b16 %v470, %v469
    %v480 = vpack.c.b16 %v472, %v471
    %489 = vmatprep.subr.bf16.mxu0 0
    %490 = vmatpush1.bf16.msra.mxu0 %v473
    %491 = vmatprep.subr.bf16.mxu0 0
    %492 = vmatpush1.bf16.msra.mxu0 %v474
    %493 = vmatprep.subr.bf16.mxu0 0
    %494 = vmatpush1.bf16.msra.mxu0 %v475
    %495 = vmatprep.subr.bf16.mxu0 0
    %496 = vmatpush1.bf16.msra.mxu0 %v476
    %497 = vmatprep.subr.bf16.mxu0 0
    %498 = vmatpush1.bf16.msra.mxu0 %v477
    %499 = vmatprep.subr.bf16.mxu0 0
    %500 = vmatpush1.bf16.msra.mxu0 %v478
    %501 = vmatprep.subr.bf16.mxu0 0
    %502 = vmatpush1.bf16.msra.mxu0 %v479
    %503 = vmatprep.subr.bf16.mxu0 0
    %504 = vmatpush1.bf16.msra.mxu0 %v480
    %505 = vmatprep.subr.bf16.mxu0 0
    %506 = vmatpush1.bf16.msra.mxu0 0
    %507 = vmatprep.subr.bf16.mxu0 0
    %508 = vmatpush1.bf16.msra.mxu0 0
    %509 = vmatprep.subr.bf16.mxu0 0
    %510 = vmatpush1.bf16.msra.mxu0 0
    %511 = vmatprep.subr.bf16.mxu0 0
    %512 = vmatpush1.bf16.msra.mxu0 0
    %513 = vmatprep.subr.bf16.mxu0 0
    %514 = vmatpush1.bf16.msra.mxu0 0
    %515 = vmatprep.subr.bf16.mxu0 0
    %516 = vmatpush1.bf16.msra.mxu0 0
    %517 = vmatprep.subr.bf16.mxu0 0
    %518 = vmatpush1.bf16.msra.mxu0 0
    %519 = vmatprep.subr.bf16.mxu0 0
    %520 = vmatpush1.bf16.msra.mxu0 0
    %521 = vmatprep.mubr.bf16.mxu0 0
    %522 = vmatmul.mubr.bf16.gmra.mrb[0].mxu0 %v432
    %v523 = vpop.f32.mrb[0].mxu0
    %v524 = vadd.f32 %v439, %v523
    %v525 = vpop.f32.mrb[0].mxu0
    %v526 = vpop.f32.mrb[0].mxu0
    %v527 = vadd.f32 %v439, %v526
    %v528 = vpop.f32.mrb[0].mxu0
    %529 = vmatprep.mubr.bf16.mxu0 0
    %530 = vmatmul.mubr.bf16.gmra.mrb[0].mxu0 %v433
    %v531 = vpop.f32.mrb[0].mxu0
    %v532 = vadd.f32 %v439, %v531
    %v533 = vpop.f32.mrb[0].mxu0
    %v534 = vpop.f32.mrb[0].mxu0
    %v535 = vadd.f32 %v439, %v534
    %v536 = vpop.f32.mrb[0].mxu0
    %537 = vdwg.mxu0
    %v538 = vmul.f32 %v524, %v524
    %v539 = vmul.f32 %v527, %v527
    %v540 = vmul.f32 %v532, %v532
    %v541 = vmul.f32 %v535, %v535
    %542 = vadd.xlane.f32.xlu0 %v538
    %v543 = vpop.xlane.xlu0 %542
    %544 = vadd.xlane.f32.xlu0 %v539
    %v545 = vpop.xlane.xlu0 %544
    %546 = vadd.xlane.f32.xlu0 %v540
    %v547 = vpop.xlane.xlu0 %546
    %548 = vadd.xlane.f32.xlu0 %v541
    %v549 = vpop.xlane.xlu0 %548
    %v550 = vmax.f32 %v543, 1e-24
    %v551 = vmax.f32 %v545, 1e-24
    %v552 = vmax.f32 %v547, 1e-24
    %v553 = vmax.f32 %v549, 1e-24
    %v554 = vrsqrt.pop %v550
    %v555 = vrsqrt.pop %v551
    %v556 = vrsqrt.pop %v552
    %v557 = vrsqrt.pop %v553
    %v558 = vmul.f32 %v524, %v554
    %v559 = vmul.f32 %v527, %v555
    %v560 = vmul.f32 %v532, %v556
    %v561 = vmul.f32 %v535, %v557
    %562 = vst [vmem:[#allocation13] sm:$0xff] %v558
    %563 = vst [vmem:[#allocation13 + $0x8] sm:$0xff] %v559
    %564 = vst [vmem:[#allocation13 + $0x10] sm:$0xff] %v560
    %565 = vst [vmem:[#allocation13 + $0x18] sm:$0xff] %v561
    %v566 = vld [vmem:[#allocation5] sm:$0xff]
    %v567 = vld [vmem:[#allocation5 + $0x8] sm:$0xff]
    %v568 = vld [vmem:[#allocation5 + $0x10] sm:$0xff]
    %v569 = vld [vmem:[#allocation5 + $0x18] sm:$0xff]
    %v570 = vld [vmem:[#allocation5 + $0x20] sm:$0xff]
    %v571 = vld [vmem:[#allocation5 + $0x28] sm:$0xff]
    %v572 = vld [vmem:[#allocation5 + $0x30] sm:$0xff]
    %v573 = vld [vmem:[#allocation5 + $0x38] sm:$0xff]
    %v574 = vld [vmem:[#allocation5 + $0x40] sm:$0xff]
    %v575 = vld [vmem:[#allocation5 + $0x48] sm:$0xff]
    %v576 = vld [vmem:[#allocation5 + $0x50] sm:$0xff]
    %v577 = vld [vmem:[#allocation5 + $0x58] sm:$0xff]
    %v578 = vpack.c.bf16 %v569, %v566
    %v579 = vpack.c.bf16 %v570, %v567
    %v580 = vpack.c.bf16 %v571, %v568
    %v581 = vpack.c.bf16 %v575, %v572
    %v582 = vpack.c.bf16 %v576, %v573
    %v583 = vpack.c.bf16 %v577, %v574
    %v584 = vld [vmem:[#allocation10] sm:$0xf]
    %v585 = vld [vmem:[#allocation10 + $0x4] sm:$0xf]
    %v586 = vld [vmem:[#allocation10 + $0x8] sm:$0xf]
    %v587 = vld [vmem:[#allocation10 + $0xc] sm:$0xf]
    %v588 = vld [vmem:[#allocation10 + $0x10] sm:$0xf]
    %v589 = vld [vmem:[#allocation10 + $0x14] sm:$0xf]
    %v590 = vld [vmem:[#allocation10 + $0x18] sm:$0xf]
    %v591 = vld [vmem:[#allocation10 + $0x1c] sm:$0xf]
    %v592 = vld [vmem:[#allocation10 + $0x20] sm:$0xf]
    %v593 = vld [vmem:[#allocation10 + $0x24] sm:$0xf]
    %v594 = vld [vmem:[#allocation10 + $0x28] sm:$0xf]
    %v595 = vld [vmem:[#allocation10 + $0x2c] sm:$0xf]
    %v596 = vld [vmem:[#allocation10 + $0x30] sm:$0xf]
    %v597 = vld [vmem:[#allocation10 + $0x34] sm:$0xf]
    %v598 = vld [vmem:[#allocation10 + $0x38] sm:$0xf]
    %v599 = vld [vmem:[#allocation10 + $0x3c] sm:$0xf]
    %v600 = vld [vmem:[#allocation10 + $0x40] sm:$0xf]
    %v601 = vld [vmem:[#allocation10 + $0x44] sm:$0xf]
    %v602 = vld [vmem:[#allocation10 + $0x48] sm:$0xf]
    %v603 = vld [vmem:[#allocation10 + $0x4c] sm:$0xf]
    %v604 = vld [vmem:[#allocation10 + $0x50] sm:$0xf]
    %v605 = vld [vmem:[#allocation10 + $0x54] sm:$0xf]
    %v606 = vld [vmem:[#allocation10 + $0x58] sm:$0xf]
    %v607 = vld [vmem:[#allocation10 + $0x5c] sm:$0xf]
    %v608 = vld [vmem:[#allocation10 + $0x60] sm:$0xf]
    %v609 = vld [vmem:[#allocation10 + $0x64] sm:$0xf]
    %v610 = vld [vmem:[#allocation10 + $0x68] sm:$0xf]
    %v611 = vld [vmem:[#allocation10 + $0x6c] sm:$0xf]
    %v612 = vld [vmem:[#allocation10 + $0x70] sm:$0xf]
    %v613 = vld [vmem:[#allocation10 + $0x74] sm:$0xf]
    %v614 = vld [vmem:[#allocation10 + $0x78] sm:$0xf]
    %v615 = vld [vmem:[#allocation10 + $0x7c] sm:$0xf]
    %v616 = vld [vmem:[#allocation10 + $0x80] sm:$0xf]
    %v617 = vld [vmem:[#allocation10 + $0x84] sm:$0xf]
    %v618 = vld [vmem:[#allocation10 + $0x88] sm:$0xf]
    %v619 = vld [vmem:[#allocation10 + $0x8c] sm:$0xf]
    %v620 = vld [vmem:[#allocation10 + $0x90] sm:$0xf]
    %v621 = vld [vmem:[#allocation10 + $0x94] sm:$0xf]
    %v622 = vld [vmem:[#allocation10 + $0x98] sm:$0xf]
    %v623 = vld [vmem:[#allocation10 + $0x9c] sm:$0xf]
    %v624 = vld [vmem:[#allocation11] sm:$0xf]
    %v625 = vld [vmem:[#allocation11 + $0x4] sm:$0xf]
    %v626 = vld [vmem:[#allocation11 + $0x8] sm:$0xf]
    %v627 = vld [vmem:[#allocation11 + $0xc] sm:$0xf]
    %v628 = vld [vmem:[#allocation11 + $0x10] sm:$0xf]
    %v629 = vld [vmem:[#allocation11 + $0x14] sm:$0xf]
    %v630 = vld [vmem:[#allocation11 + $0x18] sm:$0xf]
    %v631 = vld [vmem:[#allocation11 + $0x1c] sm:$0xf]
    %v632 = vld [vmem:[#allocation11 + $0x20] sm:$0xf]
    %v633 = vld [vmem:[#allocation11 + $0x24] sm:$0xf]
    %v634 = vld [vmem:[#allocation11 + $0x28] sm:$0xf]
    %v635 = vld [vmem:[#allocation11 + $0x2c] sm:$0xf]
    %v636 = vld [vmem:[#allocation11 + $0x30] sm:$0xf]
    %v637 = vld [vmem:[#allocation11 + $0x34] sm:$0xf]
    %v638 = vld [vmem:[#allocation11 + $0x38] sm:$0xf]
    %v639 = vld [vmem:[#allocation11 + $0x3c] sm:$0xf]
    %v640 = vld [vmem:[%s7] sm:$0x1]
    %v642 = vlaneseq
    %v643 = vshrl.u32 %v642, 7
    %v644 = vsub.s32 0, %v643
    %v645 = vrot.slane %v640, %v644
    %v687 = vunpack.c.l.b16 %v584
    %v688 = vunpack.c.l.b16 %v585
    %v689 = vunpack.c.l.b16 %v586
    %v690 = vunpack.c.l.b16 %v587
    %v691 = vunpack.c.l.b16 %v588
    %v692 = vunpack.c.l.b16 %v589
    %v693 = vunpack.c.l.b16 %v590
    %v694 = vunpack.c.l.b16 %v591
    %v695 = vunpack.c.l.b16 %v592
    %v696 = vunpack.c.l.b16 %v593
    %v697 = vunpack.c.l.b16 %v594
    %v698 = vunpack.c.l.b16 %v595
    %v699 = vunpack.c.l.b16 %v596
    %v700 = vunpack.c.l.b16 %v597
    %v701 = vunpack.c.l.b16 %v598
    %v702 = vunpack.c.l.b16 %v599
    %v703 = vunpack.c.l.b16 %v600
    %v704 = vunpack.c.l.b16 %v601
    %v705 = vunpack.c.l.b16 %v602
    %v706 = vunpack.c.l.b16 %v603
    %v707 = vunpack.c.l.b16 %v604
    %v708 = vunpack.c.l.b16 %v605
    %v709 = vunpack.c.l.b16 %v606
    %v710 = vunpack.c.l.b16 %v607
    %v711 = vunpack.c.l.b16 %v608
    %v712 = vunpack.c.l.b16 %v609
    %v713 = vunpack.c.l.b16 %v610
    %v714 = vunpack.c.l.b16 %v611
    %v715 = vunpack.c.l.b16 %v612
    %v716 = vunpack.c.l.b16 %v613
    %v717 = vunpack.c.l.b16 %v614
    %v718 = vunpack.c.l.b16 %v615
    %v719 = vunpack.c.l.b16 %v616
    %v720 = vunpack.c.l.b16 %v617
    %v721 = vunpack.c.l.b16 %v618
    %v722 = vunpack.c.l.b16 %v619
    %v723 = vunpack.c.l.b16 %v620
    %v724 = vunpack.c.l.b16 %v621
    %v725 = vunpack.c.l.b16 %v622
    %v726 = vunpack.c.l.b16 %v623
    %v727 = vpack.c.b16 %v688, %v687
    %v728 = vpack.c.b16 %v690, %v689
    %v729 = vpack.c.b16 %v692, %v691
    %v730 = vpack.c.b16 %v694, %v693
    %v731 = vpack.c.b16 %v696, %v695
    %v732 = vpack.c.b16 %v698, %v697
    %v733 = vpack.c.b16 %v700, %v699
    %v734 = vpack.c.b16 %v702, %v701
    %v735 = vpack.c.b16 %v704, %v703
    %v736 = vpack.c.b16 %v706, %v705
    %v737 = vpack.c.b16 %v708, %v707
    %v738 = vpack.c.b16 %v710, %v709
    %v739 = vpack.c.b16 %v712, %v711
    %v740 = vpack.c.b16 %v714, %v713
    %v741 = vpack.c.b16 %v716, %v715
    %v742 = vpack.c.b16 %v718, %v717
    %v743 = vpack.c.b16 %v720, %v719
    %v744 = vpack.c.b16 %v722, %v721
    %v745 = vpack.c.b16 %v724, %v723
    %v746 = vpack.c.b16 %v726, %v725
    %v768 = vsel %vm323, %v580, 0
    %v771 = vsel %vm323, %v583, 0
    %773 = vmatprep.subr.bf16.mxu0 0
    %774 = vmatpush1.bf16.msra.mxu0 %v727
    %775 = vmatprep.subr.bf16.mxu0 0
    %776 = vmatpush1.bf16.msra.mxu0 %v728
    %777 = vmatprep.subr.bf16.mxu0 0
    %778 = vmatpush1.bf16.msra.mxu0 %v729
    %779 = vmatprep.subr.bf16.mxu0 0
    %780 = vmatpush1.bf16.msra.mxu0 %v730
    %781 = vmatprep.subr.bf16.mxu0 0
    %782 = vmatpush1.bf16.msra.mxu0 %v731
    %783 = vmatprep.subr.bf16.mxu0 0
    %784 = vmatpush1.bf16.msra.mxu0 %v732
    %785 = vmatprep.subr.bf16.mxu0 0
    %786 = vmatpush1.bf16.msra.mxu0 %v733
    %787 = vmatprep.subr.bf16.mxu0 0
    %788 = vmatpush1.bf16.msra.mxu0 %v734
    %789 = vmatprep.subr.bf16.mxu0 0
    %790 = vmatpush1.bf16.msra.mxu0 %v735
    %791 = vmatprep.subr.bf16.mxu0 0
    %792 = vmatpush1.bf16.msra.mxu0 %v736
    %793 = vmatprep.subr.bf16.mxu0 0
    %794 = vmatpush1.bf16.msra.mxu0 %v737
    %795 = vmatprep.subr.bf16.mxu0 0
    %796 = vmatpush1.bf16.msra.mxu0 %v738
    %797 = vmatprep.subr.bf16.mxu0 0
    %798 = vmatpush1.bf16.msra.mxu0 %v739
    %799 = vmatprep.subr.bf16.mxu0 0
    %800 = vmatpush1.bf16.msra.mxu0 %v740
    %801 = vmatprep.subr.bf16.mxu0 0
    %802 = vmatpush1.bf16.msra.mxu0 %v741
    %803 = vmatprep.subr.bf16.mxu0 0
    %804 = vmatpush1.bf16.msra.mxu0 %v742
    %805 = vmatprep.mubr.bf16.mxu0 %v579
    %806 = vmatmul.mubr.bf16.gmra.mrb[0].mxu0 %v578
    %v807 = vpop.f32.mrb[0].mxu0
    %v808 = vadd.f32 %v645, %v807
    %v809 = vpop.f32.mrb[0].mxu0
    %v810 = vpop.f32.mrb[0].mxu0
    %v811 = vadd.f32 %v645, %v810
    %v812 = vpop.f32.mrb[0].mxu0
    %813 = vmatprep.mubr.bf16.mxu0 %v582
    %814 = vmatmul.mubr.bf16.gmra.mrb[0].mxu0 %v581
    %v815 = vpop.f32.mrb[0].mxu0
    %v816 = vadd.f32 %v645, %v815
    %v817 = vpop.f32.mrb[0].mxu0
    %v818 = vpop.f32.mrb[0].mxu0
    %v819 = vadd.f32 %v645, %v818
    %v820 = vpop.f32.mrb[0].mxu0
    %821 = vdwg.mxu0
    %822 = vmatprep.subr.bf16.mxu0 0
    %823 = vmatpush1.bf16.msra.mxu0 %v743
    %824 = vmatprep.subr.bf16.mxu0 0
    %825 = vmatpush1.bf16.msra.mxu0 %v744
    %826 = vmatprep.subr.bf16.mxu0 0
    %827 = vmatpush1.bf16.msra.mxu0 %v745
    %828 = vmatprep.subr.bf16.mxu0 0
    %829 = vmatpush1.bf16.msra.mxu0 %v746
    %830 = vmatprep.subr.bf16.mxu0 0
    %831 = vmatpush1.bf16.msra.mxu0 0
    %832 = vmatprep.subr.bf16.mxu0 0
    %833 = vmatpush1.bf16.msra.mxu0 0
    %834 = vmatprep.subr.bf16.mxu0 0
    %835 = vmatpush1.bf16.msra.mxu0 0
    %836 = vmatprep.subr.bf16.mxu0 0
    %837 = vmatpush1.bf16.msra.mxu0 0
    %838 = vmatprep.subr.bf16.mxu0 0
    %839 = vmatpush1.bf16.msra.mxu0 0
    %840 = vmatprep.subr.bf16.mxu0 0
    %841 = vmatpush1.bf16.msra.mxu0 0
    %842 = vmatprep.subr.bf16.mxu0 0
    %843 = vmatpush1.bf16.msra.mxu0 0
    %844 = vmatprep.subr.bf16.mxu0 0
    %845 = vmatpush1.bf16.msra.mxu0 0
    %846 = vmatprep.subr.bf16.mxu0 0
    %847 = vmatpush1.bf16.msra.mxu0 0
    %848 = vmatprep.subr.bf16.mxu0 0
    %849 = vmatpush1.bf16.msra.mxu0 0
    %850 = vmatprep.subr.bf16.mxu0 0
    %851 = vmatpush1.bf16.msra.mxu0 0
    %852 = vmatprep.subr.bf16.mxu0 0
    %853 = vmatpush1.bf16.msra.mxu0 0
    %854 = vmatprep.mubr.bf16.mxu0 0
    %855 = vmatmul.mubr.bf16.gmra.mrb[0].mxu0 %v768
    %v856 = vpop.f32.mrb[0].mxu0
    %v857 = vadd.f32 %v808, %v856
    %v858 = vpop.f32.mrb[0].mxu0
    %v859 = vpop.f32.mrb[0].mxu0
    %v860 = vadd.f32 %v811, %v859
    %v861 = vpop.f32.mrb[0].mxu0
    %862 = vmatprep.mubr.bf16.mxu0 0
    %863 = vmatmul.mubr.bf16.gmra.mrb[0].mxu0 %v771
    %v864 = vpop.f32.mrb[0].mxu0
    %v865 = vadd.f32 %v816, %v864
    %v866 = vpop.f32.mrb[0].mxu0
    %v867 = vpop.f32.mrb[0].mxu0
    %v868 = vadd.f32 %v819, %v867
    %v869 = vpop.f32.mrb[0].mxu0
    %870 = vdwg.mxu0
    %v871 = vmax.f32 %v857, 0.0
    %v872 = vmax.f32 %v860, 0.0
    %v873 = vmax.f32 %v865, 0.0
    %v874 = vmax.f32 %v868, 0.0
    %v875 = vpack.c.bf16 %v872, %v871
    %v876 = vpack.c.bf16 %v874, %v873
    %v877 = vld [vmem:[%s9] sm:$0x1]
    %v879 = vlaneseq
    %v880 = vshrl.u32 %v879, 7
    %v881 = vsub.s32 0, %v880
    %v882 = vrot.slane %v877, %v881
    %v900 = vunpack.c.l.b16 %v624
    %v901 = vunpack.c.l.b16 %v625
    %v902 = vunpack.c.l.b16 %v626
    %v903 = vunpack.c.l.b16 %v627
    %v904 = vunpack.c.l.b16 %v628
    %v905 = vunpack.c.l.b16 %v629
    %v906 = vunpack.c.l.b16 %v630
    %v907 = vunpack.c.l.b16 %v631
    %v908 = vunpack.c.l.b16 %v632
    %v909 = vunpack.c.l.b16 %v633
    %v910 = vunpack.c.l.b16 %v634
    %v911 = vunpack.c.l.b16 %v635
    %v912 = vunpack.c.l.b16 %v636
    %v913 = vunpack.c.l.b16 %v637
    %v914 = vunpack.c.l.b16 %v638
    %v915 = vunpack.c.l.b16 %v639
    %v916 = vpack.c.b16 %v901, %v900
    %v917 = vpack.c.b16 %v903, %v902
    %v918 = vpack.c.b16 %v905, %v904
    %v919 = vpack.c.b16 %v907, %v906
    %v920 = vpack.c.b16 %v909, %v908
    %v921 = vpack.c.b16 %v911, %v910
    %v922 = vpack.c.b16 %v913, %v912
    %v923 = vpack.c.b16 %v915, %v914
    %932 = vmatprep.subr.bf16.mxu0 0
    %933 = vmatpush1.bf16.msra.mxu0 %v916
    %934 = vmatprep.subr.bf16.mxu0 0
    %935 = vmatpush1.bf16.msra.mxu0 %v917
    %936 = vmatprep.subr.bf16.mxu0 0
    %937 = vmatpush1.bf16.msra.mxu0 %v918
    %938 = vmatprep.subr.bf16.mxu0 0
    %939 = vmatpush1.bf16.msra.mxu0 %v919
    %940 = vmatprep.subr.bf16.mxu0 0
    %941 = vmatpush1.bf16.msra.mxu0 %v920
    %942 = vmatprep.subr.bf16.mxu0 0
    %943 = vmatpush1.bf16.msra.mxu0 %v921
    %944 = vmatprep.subr.bf16.mxu0 0
    %945 = vmatpush1.bf16.msra.mxu0 %v922
    %946 = vmatprep.subr.bf16.mxu0 0
    %947 = vmatpush1.bf16.msra.mxu0 %v923
    %948 = vmatprep.subr.bf16.mxu0 0
    %949 = vmatpush1.bf16.msra.mxu0 0
    %950 = vmatprep.subr.bf16.mxu0 0
    %951 = vmatpush1.bf16.msra.mxu0 0
    %952 = vmatprep.subr.bf16.mxu0 0
    %953 = vmatpush1.bf16.msra.mxu0 0
    %954 = vmatprep.subr.bf16.mxu0 0
    %955 = vmatpush1.bf16.msra.mxu0 0
    %956 = vmatprep.subr.bf16.mxu0 0
    %957 = vmatpush1.bf16.msra.mxu0 0
    %958 = vmatprep.subr.bf16.mxu0 0
    %959 = vmatpush1.bf16.msra.mxu0 0
    %960 = vmatprep.subr.bf16.mxu0 0
    %961 = vmatpush1.bf16.msra.mxu0 0
    %962 = vmatprep.subr.bf16.mxu0 0
    %963 = vmatpush1.bf16.msra.mxu0 0
    %964 = vmatprep.mubr.bf16.mxu0 0
    %965 = vmatmul.mubr.bf16.gmra.mrb[0].mxu0 %v875
    %v966 = vpop.f32.mrb[0].mxu0
    %v967 = vadd.f32 %v882, %v966
    %v968 = vpop.f32.mrb[0].mxu0
    %v969 = vpop.f32.mrb[0].mxu0
    %v970 = vadd.f32 %v882, %v969
    %v971 = vpop.f32.mrb[0].mxu0
    %972 = vmatprep.mubr.bf16.mxu0 0
    %973 = vmatmul.mubr.bf16.gmra.mrb[0].mxu0 %v876
    %v974 = vpop.f32.mrb[0].mxu0
    %v975 = vadd.f32 %v882, %v974
    %v976 = vpop.f32.mrb[0].mxu0
    %v977 = vpop.f32.mrb[0].mxu0
    %v978 = vadd.f32 %v882, %v977
    %v979 = vpop.f32.mrb[0].mxu0
    %980 = vdwg.mxu0
    %v981 = vmul.f32 %v967, %v967
    %v982 = vmul.f32 %v970, %v970
    %v983 = vmul.f32 %v975, %v975
    %v984 = vmul.f32 %v978, %v978
    %985 = vadd.xlane.f32.xlu0 %v981
    %v986 = vpop.xlane.xlu0 %985
    %987 = vadd.xlane.f32.xlu0 %v982
    %v988 = vpop.xlane.xlu0 %987
    %989 = vadd.xlane.f32.xlu0 %v983
    %v990 = vpop.xlane.xlu0 %989
    %991 = vadd.xlane.f32.xlu0 %v984
    %v992 = vpop.xlane.xlu0 %991
    %v993 = vmax.f32 %v986, 1e-24
    %v994 = vmax.f32 %v988, 1e-24
    %v995 = vmax.f32 %v990, 1e-24
    %v996 = vmax.f32 %v992, 1e-24
    %v997 = vrsqrt.pop %v993
    %v998 = vrsqrt.pop %v994
    %v999 = vrsqrt.pop %v995
    %v1000 = vrsqrt.pop %v996
    %v1001 = vmul.f32 %v967, %v997
    %v1002 = vmul.f32 %v970, %v998
    %v1003 = vmul.f32 %v975, %v999
    %v1004 = vmul.f32 %v978, %v1000
    %1005 = vst [vmem:[#allocation14] sm:$0xff] %v1001
    %1006 = vst [vmem:[#allocation14 + $0x8] sm:$0xff] %v1002
    %1007 = vst [vmem:[#allocation14 + $0x10] sm:$0xff] %v1003
    %1008 = vst [vmem:[#allocation14 + $0x18] sm:$0xff] %v1004
    // Predicated region
    $region66: #{tpu_custom_call.1} parent=1 // pred_check
      _
    $region67: #{tpu_custom_call.1} parent=1 // pred_check_branch
      %1010 = sbr.rel (0) target = $region69
    $region68: #{tpu_custom_call.1} parent=1 // pred_region
      %s1012 = ssub.s32 512, 512
      %1013 = vsyncadd [#allocation4], %s1012
      %s1014 = sshll.u32 [#allocation13], 4
      %s1015 = int_to_ptr.vmem [resolvable:$true] %s1014
      %1020 = dma.vmem_to_hbm [thread:$0]  %s1015, 512, %s10, [#allocation4], 128, 128, 8
    $region69: #{tpu_custom_call.1} parent=1 // pred_fallthru
      _
    // Predicated region
    $region70: #{tpu_custom_call.1} parent=1 // pred_check
      _
    $region71: #{tpu_custom_call.1} parent=1 // pred_check_branch
      %1022 = sbr.rel (0) target = $region73
    $region72: #{tpu_custom_call.1} parent=1 // pred_region
      %s1024 = ssub.s32 512, 512
      %1025 = vsyncadd [#allocation15], %s1024
      %s1026 = sshll.u32 [#allocation14], 4
      %s1027 = int_to_ptr.vmem [resolvable:$true] %s1026
      %1032 = dma.vmem_to_hbm [thread:$0]  %s1027, 512, %s11, [#allocation15], 128, 128, 8
    $region73: #{tpu_custom_call.1} parent=1 // pred_fallthru
      _
    // Predicated region
    $region74: #{tpu_custom_call.1} parent=1 // pred_check
      _
    $region75: #{tpu_custom_call.1} parent=1 // pred_check_branch
      %1034 = sbr.rel (0) target = $region77
    $region76: #{tpu_custom_call.1} parent=1 // pred_region
      %1035 = dma.done [#allocation4], 512
    $region77: #{tpu_custom_call.1} parent=1 // pred_fallthru
      _
    // Predicated region
    $region78: #{tpu_custom_call.1} parent=1 // pred_check
      _
    $region79: #{tpu_custom_call.1} parent=1 // pred_check_branch
      %1037 = sbr.rel (0) target = $region81
    $region80: #{tpu_custom_call.1} parent=1 // pred_region
      %1038 = dma.done [#allocation15], 512
    $region81: #{tpu_custom_call.1} parent=1 // pred_fallthru
      _
    %1039 = vsyncpa [#allocation3], 1
    %1040 = vsyncpa [#allocation6], 1
    %1041 = vsyncpa [#allocation9], 1
    %1042 = vsyncpa [#allocation12], 1
    %1043 = vsyncpa [#allocation4], 1
    %1044 = vsyncpa [#allocation15], 1

</llo_original>
